<compile_context>
chip_gen: v7x
topology: tpu7x:2x2x1
jax: 0.10.0
libtpu: 0.0.40
codegen_flags: <defaults>
</compile_context>

<pallas_src>
import functools

import jax
import jax.numpy as jnp
from jax import lax
from jax.experimental import pallas as pl
from jax.experimental.pallas import tpu as pltpu


def _round_up(x, m):
    return ((x + m - 1) // m) * m


def _linear_ard_kernel(xb_ref, b_ref, c_ref, o_ref, *, compute_dtype):
    """One batch tile.

    xb_ref: (tm, Dp)    tile of x rows (streamed)
    b_ref : (Dp, 2*Dp)  hoisted operand concat([-0.5*W, W*x], axis=1) (resident)
    c_ref : (1, Dp)     hoisted bias - 0.5*sum(W*x^2, axis=1)         (resident)
    o_ref : (tm, Dp)    output tile
    """
    xb = xb_ref[...]
    # Fused LHS [x^2 | x] -> single MXU push over K = 2*Dp (one push/drain per tile).
    a = jnp.concatenate([xb * xb, xb], axis=-1).astype(compute_dtype)
    acc = lax.dot_general(
        a,
        b_ref[...].astype(compute_dtype),
        dimension_numbers=(((1,), (1,)), ((), ())),   # contract last dims; no .T
        preferred_element_type=jnp.float32,
    )
    # Epilogue is a single broadcast add (all scalars/bias folded into b_ref/c_ref).
    o_ref[...] = acc + c_ref[...]


def linear_ard_forward(x, weight, bias, *, tm=None, use_bf16_matmul=False):
    """Pallas implementation of LinearARD.forward.

    x:      (N, D) float32 with N == D (required by the PyTorch broadcast `weight * x`)
    weight: (D, D) float32
    bias:   (D,)   float32
    returns (N, D) float32
    """
    n, d = x.shape
    assert weight.shape == (d, d) and bias.shape == (d,)
    assert n == d, "LinearARD forward requires batch == dim (PyTorch broadcast rule)"

    x = x.astype(jnp.float32)
    weight = weight.astype(jnp.float32)
    bias = bias.astype(jnp.float32)

    # ---- Tiling -----------------------------------------------------------
    dp = _round_up(d, 128)                 # lane-dense feature axis (unmasked stores)
    if tm is None:
        tm = n if n <= 256 else 256        # big batch tiles; single shot for small N
    tm = int(min(max(tm, 1), 1024))
    if tm >= n:
        tm = n                             # one grid step (full-dim block exception)
    else:
        tm = min(_round_up(tm, 8), n)      # sublane-aligned tile
    n_pad = _round_up(n, tm)

    # ---- Hoisted, grid-invariant precompute (runs once, outside the grid) --
    w_p = jnp.pad(weight, ((0, dp - d), (0, dp - d)))
    xc_p = jnp.pad(x, ((0, dp - d), (0, dp - d)))            # "centers" = x itself
    b_op = jnp.concatenate([-0.5 * w_p, w_p * xc_p], axis=1)            # (dp, 2*dp)
    c_op = (jnp.pad(bias, (0, dp - d))
            - 0.5 * jnp.sum(w_p * xc_p * xc_p, axis=1)).reshape(1, dp)  # (1, dp)

    xb_p = jnp.pad(x, ((0, n_pad - n), (0, dp - d)))          # x streamed exactly once

    compute_dtype = jnp.bfloat16 if use_bf16_matmul else jnp.float32
    if use_bf16_matmul:
        # Fast MXU path on v6e/v7x (f32 accumulation kept via preferred_element_type).
        b_op = b_op.astype(jnp.bfloat16)

    # ---- VMEM budget: double-buffered x/out tiles + resident operands ------
    est = 4 * (2 * tm * dp          # x tiles (double-buffered)
               + 2 * tm * dp        # out tiles
               + 2 * dp * 2 * dp    # resident B (conservatively x2)
               + 2 * dp)            # resident c
    vmem_limit = int(min(max(2 * est, 32 * 1024 * 1024), 64 * 1024 * 1024))

    grid = (n_pad // tm,)
    out_p = pl.pallas_call(
        functools.partial(_linear_ard_kernel, compute_dtype=compute_dtype),
        out_shape=jax.ShapeDtypeStruct((n_pad, dp), jnp.float32),
        grid=grid,
        in_specs=[
            pl.BlockSpec((tm, dp), lambda i: (i, 0)),        # x batch tile (streamed)
            pl.BlockSpec((dp, 2 * dp), lambda i: (0, 0)),    # hoisted B (resident)
            pl.BlockSpec((1, dp), lambda i: (0, 0)),         # hoisted c (resident)
        ],
        out_specs=pl.BlockSpec((tm, dp), lambda i: (i, 0)),
        compiler_params=pltpu.CompilerParams(
            dimension_semantics=("parallel",),               # megacore-shardable batch loop
            vmem_limit_bytes=vmem_limit,
        ),
    )(xb_p, b_op, c_op)

    return out_p[:n, :d]


def linear_ard_reference(x, weight, bias):
    """Pure-JAX transcription of the PyTorch forward, for verification."""
    x2w = jnp.matmul(x ** 2, weight.T)
    xxw = jnp.matmul(x, (weight * x).T)
    wx = jnp.sum(weight * x ** 2, axis=1, keepdims=True)
    return -0.5 * (x2w - 2.0 * xxw + wx.T) + bias


if __name__ == "__main__":
    dim = 32  # small, self-consistent: batch == feature dim (required by the module)

    key = jax.random.PRNGKey(0)
    k_w, k_x, k_b = jax.random.split(key, 3)

    # reset_parameters(): weight ~ N(0, 0.02), bias = 0  (deterministic via PRNGKey)
    weight = 0.02 * jax.random.normal(k_w, (dim, dim), dtype=jnp.float32)
    bias = jnp.zeros((dim,), dtype=jnp.float32)
    x = jax.random.normal(k_x, (dim, dim), dtype=jnp.float32)

    out = linear_ard_forward(x, weight, bias)
    out = jax.block_until_ready(out)
    ref = linear_ard_reference(x, weight, bias)
    assert out.shape == (dim, dim)
    assert jnp.allclose(out, ref, atol=1e-5, rtol=1e-5), "mismatch vs reference"

    # Second check with a non-zero bias to exercise the folded bias/term3 path.
    bias2 = 0.1 * jax.random.normal(k_b, (dim,), dtype=jnp.float32)
    out2 = jax.block_until_ready(linear_ard_forward(x, weight, bias2))
    ref2 = linear_ard_reference(x, weight, bias2)
    assert jnp.allclose(out2, ref2, atol=1e-5, rtol=1e-5), "mismatch vs reference (bias)"

    print("KERNEL_OK")
</pallas_src>

<mosaic_0001>
module attributes {stable_mosaic.version = 11 : i64} {
  func.func @_linear_ard_kernel(%arg0: i32, %arg1: memref<32x128xf32, #tpu.memory_space<vmem>>, %arg2: memref<128x256xf32, #tpu.memory_space<vmem>>, %arg3: memref<1x128xf32, #tpu.memory_space<vmem>>, %arg4: memref<32x128xf32, #tpu.memory_space<vmem>>) attributes {dimension_semantics = [#tpu.dimension_semantics<parallel>], iteration_bounds = array<i64: 1>, scalar_prefetch = 0 : i64, scratch_operands = 0 : i64, tpu.core_type = #tpu.core_type<tc>, window_params = [{transform_indices = @transform_0, window_bounds = array<i64: 32, 128>}, {pipeline_mode = #tpu.pipeline_mode<synchronous>, transform_indices = @transform_1, window_bounds = array<i64: 128, 256>}, {pipeline_mode = #tpu.pipeline_mode<synchronous>, transform_indices = @transform_2, window_bounds = array<i64: 1, 128>}, {transform_indices = @transform_3, window_bounds = array<i64: 32, 128>}]} {
    %c0 = arith.constant 0 : index
    %c0_0 = arith.constant 0 : index
    %0 = vector.load %arg1[%c0, %c0_0] : memref<32x128xf32, #tpu.memory_space<vmem>>, vector<32x128xf32>
    %1 = arith.mulf %0, %0 : vector<32x128xf32>
    %2 = tpu.concatenate %1, %0 in 1 : vector<32x128xf32>, vector<32x128xf32> -> vector<32x256xf32>
    %c0_1 = arith.constant 0 : index
    %c0_2 = arith.constant 0 : index
    %3 = vector.load %arg2[%c0_1, %c0_2] : memref<128x256xf32, #tpu.memory_space<vmem>>, vector<128x256xf32>
    %cst = arith.constant dense<0.000000e+00> : vector<32x128xf32>
    %4 = tpu.matmul %2, %3, %cst {dimension_numbers = #tpu.dot_dimension_numbers<[1], [1], [0], [0], [0, 0, 1, 0], [], []>} : vector<32x256xf32>, vector<128x256xf32>, vector<32x128xf32> -> vector<32x128xf32>
    %c0_3 = arith.constant 0 : index
    %c0_4 = arith.constant 0 : index
    %5 = vector.load %arg3[%c0_3, %c0_4] : memref<1x128xf32, #tpu.memory_space<vmem>>, vector<1x128xf32>
    %6 = vector.broadcast %5 : vector<1x128xf32> to vector<32x128xf32>
    %7 = arith.addf %4, %6 : vector<32x128xf32>
    %c0_5 = arith.constant 0 : index
    %c0_6 = arith.constant 0 : index
    %8 = vector.load %arg4[%c0_5, %c0_6] : memref<32x128xf32, #tpu.memory_space<vmem>>, vector<32x128xf32>
    tpu.vector_store %arg4[%c0_5, %c0_6], %7 {strides = array<i32>} : memref<32x128xf32, #tpu.memory_space<vmem>>, vector<32x128xf32>,
    return
  }
  func.func @transform_0(%arg0: i32) -> (i32, i32) {
    %c0_i32 = arith.constant 0 : i32
    %c0_i32_0 = arith.constant 0 : i32
    return %arg0, %c0_i32 : i32, i32
  }
  func.func @transform_1(%arg0: i32) -> (i32, i32) {
    %c0_i32 = arith.constant 0 : i32
    %c0_i32_0 = arith.constant 0 : i32
    %c0_i32_1 = arith.constant 0 : i32
    return %c0_i32, %c0_i32_0 : i32, i32
  }
  func.func @transform_2(%arg0: i32) -> (i32, i32) {
    %c0_i32 = arith.constant 0 : i32
    %c0_i32_0 = arith.constant 0 : i32
    %c0_i32_1 = arith.constant 0 : i32
    return %c0_i32, %c0_i32_0 : i32, i32
  }
  func.func @transform_3(%arg0: i32) -> (i32, i32) {
    %c0_i32 = arith.constant 0 : i32
    %c0_i32_0 = arith.constant 0 : i32
    return %arg0, %c0_i32 : i32, i32
  }
}

</mosaic_0001>

<llo_original>
// kernel: tpu_custom_call.1
$region0: #{tpu_custom_call.1}
  #allocation0 [shape = 'u32[]', space=smem, size = 0x4, offset = 0x4, fixed_abs, tag = 'smem constant byte address 0x4 - core index']
  #allocation1 [shape = 'u32[144,128]{1,0:T(1,128)}', space=vmem, size = 0x12000, scoped, tag = 'internal scratch']
  %s0 = inlined_call_operand.hbm [shape: f32[32,128], index: 0, kind: input, shape index: {}]
  %s1 = inlined_call_operand.hbm [shape: f32[128,256], index: 1, kind: input, shape index: {}]
  %s2 = inlined_call_operand.vmem [shape: f32[1,128], index: 2, kind: input, shape index: {}]
  %s3 = inlined_call_operand.hbm [shape: f32[32,128], index: 3, kind: output, shape index: {}]
  %s4 = sld [smem:[#allocation0]]
  $region30: #{tpu_custom_call.1} parent=0
    _
  %s6 = ssub.s32 1, %s4
  %s7 = scalar_select 0, %s6, %s4
  $region1: #{tpu_custom_call.1} parent=0
    #allocation2 [shape = 'u8[16384]{0}', space=vmem, size = 0x4000, scoped, tag = 'input window, operand 0, single buffered']
    #allocation3 [shape = 's32[1]{0}', space=sflag, size = 0x4, scoped, tag = 'scoped memory for tpu_custom_call.1']
    #allocation4 [shape = 's32[1]{0}', space=sflag, size = 0x4, scoped, tag = 'scoped memory for tpu_custom_call.1']
    #allocation5 [shape = 'u8[131072]{0}', space=vmem, size = 0x20000, scoped, tag = 'input window, operand 1, single buffered']
    #allocation6 [shape = 's32[1]{0}', space=sflag, size = 0x4, scoped, tag = 'scoped memory for tpu_custom_call.1']
    #allocation7 [shape = 'u8[16384]{0}', space=vmem, size = 0x4000, scoped, tag = 'output window, operand 0, single buffered']
    %8 = vsyncpa [#allocation3], 0
    %9 = vsyncpa [#allocation6], 0
    %10 = vsyncpa [#allocation4], 0
    // Predicated region
    $region2: #{tpu_custom_call.1} parent=1 // pred_check
      _
    $region3: #{tpu_custom_call.1} parent=1 // pred_check_branch
      %12 = sbr.rel (0) target = $region5
    $region4: #{tpu_custom_call.1} parent=1 // pred_region
      %s14 = ssub.s32 512, 512
      %15 = vsyncadd [#allocation3], %s14
      %s16 = sshll.u32 [#allocation2], 4
      %s17 = int_to_ptr.vmem [resolvable:$true] %s16
      %22 = dma.hbm_to_vmem [thread:$0]  %s0, 512, %s17, [#allocation3], 128, 128, 8
    $region5: #{tpu_custom_call.1} parent=1 // pred_fallthru
      _
    // Predicated region
    $region6: #{tpu_custom_call.1} parent=1 // pred_check
      _
    $region7: #{tpu_custom_call.1} parent=1 // pred_check_branch
      %24 = sbr.rel (0) target = $region9
    $region8: #{tpu_custom_call.1} parent=1 // pred_region
      %s26 = ssub.s32 4096, 4096
      %27 = vsyncadd [#allocation6], %s26
      %s28 = sshll.u32 [#allocation5], 4
      %s29 = int_to_ptr.vmem [resolvable:$true] %s28
      %34 = dma.hbm_to_vmem [thread:$0]  %s1, 4096, %s29, [#allocation6], 256, 256, 16
    $region9: #{tpu_custom_call.1} parent=1 // pred_fallthru
      _
    // Predicated region
    $region10: #{tpu_custom_call.1} parent=1 // pred_check
      _
    $region11: #{tpu_custom_call.1} parent=1 // pred_check_branch
      %36 = sbr.rel (0) target = $region13
    $region12: #{tpu_custom_call.1} parent=1 // pred_region
      _
    $region13: #{tpu_custom_call.1} parent=1 // pred_fallthru
      _
    // Predicated region
    $region14: #{tpu_custom_call.1} parent=1 // pred_check
      _
    $region15: #{tpu_custom_call.1} parent=1 // pred_check_branch
      %38 = sbr.rel (0) target = $region17
    $region16: #{tpu_custom_call.1} parent=1 // pred_region
      %39 = dma.done [#allocation3], 512
    $region17: #{tpu_custom_call.1} parent=1 // pred_fallthru
      _
    // Predicated region
    $region18: #{tpu_custom_call.1} parent=1 // pred_check
      _
    $region19: #{tpu_custom_call.1} parent=1 // pred_check_branch
      %41 = sbr.rel (0) target = $region21
    $region20: #{tpu_custom_call.1} parent=1 // pred_region
      %42 = dma.done [#allocation6], 4096
    $region21: #{tpu_custom_call.1} parent=1 // pred_fallthru
      _
    %v43 = vld [vmem:[#allocation2] sm:$0xff]
    %v44 = vld [vmem:[#allocation2 + $0x8] sm:$0xff]
    %v45 = vld [vmem:[#allocation2 + $0x10] sm:$0xff]
    %v46 = vld [vmem:[#allocation2 + $0x18] sm:$0xff]
    %v47 = vmul.f32 %v43, %v43
    %v48 = vmul.f32 %v44, %v44
    %v49 = vmul.f32 %v45, %v45
    %v50 = vmul.f32 %v46, %v46
    %v51 = vld [vmem:[#allocation5] sm:$0xff]
    %v52 = vld [vmem:[#allocation5 + $0x8] sm:$0xff]
    %v53 = vld [vmem:[#allocation5 + $0x10] sm:$0xff]
    %v54 = vld [vmem:[#allocation5 + $0x18] sm:$0xff]
    %v55 = vld [vmem:[#allocation5 + $0x20] sm:$0xff]
    %v56 = vld [vmem:[#allocation5 + $0x28] sm:$0xff]
    %v57 = vld [vmem:[#allocation5 + $0x30] sm:$0xff]
    %v58 = vld [vmem:[#allocation5 + $0x38] sm:$0xff]
    %v59 = vld [vmem:[#allocation5 + $0x40] sm:$0xff]
    %v60 = vld [vmem:[#allocation5 + $0x48] sm:$0xff]
    %v61 = vld [vmem:[#allocation5 + $0x50] sm:$0xff]
    %v62 = vld [vmem:[#allocation5 + $0x58] sm:$0xff]
    %v63 = vld [vmem:[#allocation5 + $0x60] sm:$0xff]
    %v64 = vld [vmem:[#allocation5 + $0x68] sm:$0xff]
    %v65 = vld [vmem:[#allocation5 + $0x70] sm:$0xff]
    %v66 = vld [vmem:[#allocation5 + $0x78] sm:$0xff]
    %v67 = vld [vmem:[#allocation5 + $0x80] sm:$0xff]
    %v68 = vld [vmem:[#allocation5 + $0x88] sm:$0xff]
    %v69 = vld [vmem:[#allocation5 + $0x90] sm:$0xff]
    %v70 = vld [vmem:[#allocation5 + $0x98] sm:$0xff]
    %v71 = vld [vmem:[#allocation5 + $0xa0] sm:$0xff]
    %v72 = vld [vmem:[#allocation5 + $0xa8] sm:$0xff]
    %v73 = vld [vmem:[#allocation5 + $0xb0] sm:$0xff]
    %v74 = vld [vmem:[#allocation5 + $0xb8] sm:$0xff]
    %v75 = vld [vmem:[#allocation5 + $0xc0] sm:$0xff]
    %v76 = vld [vmem:[#allocation5 + $0xc8] sm:$0xff]
    %v77 = vld [vmem:[#allocation5 + $0xd0] sm:$0xff]
    %v78 = vld [vmem:[#allocation5 + $0xd8] sm:$0xff]
    %v79 = vld [vmem:[#allocation5 + $0xe0] sm:$0xff]
    %v80 = vld [vmem:[#allocation5 + $0xe8] sm:$0xff]
    %v81 = vld [vmem:[#allocation5 + $0xf0] sm:$0xff]
    %v82 = vld [vmem:[#allocation5 + $0xf8] sm:$0xff]
    %v83 = vld [vmem:[%s2] sm:$0x1]
    %v85 = vlaneseq
    %v86 = vshrl.u32 %v85, 7
    %v87 = vsub.s32 0, %v86
    %v88 = vrot.slane %v83, %v87
    %90 = vmatprep.subr.mxu0 %v52
    %91 = vmatpush1.xpose.msra.mxu0 %v51
    %92 = vmatprep.subr.mxu0 %v54
    %93 = vmatpush1.xpose.msra.mxu0 %v53
    %94 = vmatprep.subr.mxu0 %v56
    %95 = vmatpush1.xpose.msra.mxu0 %v55
    %96 = vmatprep.subr.mxu0 %v58
    %97 = vmatpush1.xpose.msra.mxu0 %v57
    %98 = vmatprep.subr.mxu0 %v60
    %99 = vmatpush1.xpose.msra.mxu0 %v59
    %100 = vmatprep.subr.mxu0 %v62
    %101 = vmatpush1.xpose.msra.mxu0 %v61
    %102 = vmatprep.subr.mxu0 %v64
    %103 = vmatpush1.xpose.msra.mxu0 %v63
    %104 = vmatprep.subr.mxu0 %v66
    %105 = vmatpush1.xpose.msra.mxu0 %v65
    %106 = vmatprep.subr.mxu0 %v68
    %107 = vmatpush1.xpose.msra.mxu0 %v67
    %108 = vmatprep.subr.mxu0 %v70
    %109 = vmatpush1.xpose.msra.mxu0 %v69
    %110 = vmatprep.subr.mxu0 %v72
    %111 = vmatpush1.xpose.msra.mxu0 %v71
    %112 = vmatprep.subr.mxu0 %v74
    %113 = vmatpush1.xpose.msra.mxu0 %v73
    %114 = vmatprep.subr.mxu0 %v76
    %115 = vmatpush1.xpose.msra.mxu0 %v75
    %116 = vmatprep.subr.mxu0 %v78
    %117 = vmatpush1.xpose.msra.mxu0 %v77
    %118 = vmatprep.subr.mxu0 %v80
    %119 = vmatpush1.xpose.msra.mxu0 %v79
    %120 = vmatprep.subr.mxu0 %v82
    %121 = vmatpush1.xpose.msra.mxu0 %v81
    %122 = vmatprep.subr.mxu0 0.0
    %123 = vmatpush1.xpose.msra.mxu0 0.0
    %124 = vmatprep.subr.mxu0 0.0
    %125 = vmatpush1.xpose.msra.mxu0 0.0
    %126 = vmatprep.subr.mxu0 0.0
    %127 = vmatpush1.xpose.msra.mxu0 0.0
    %128 = vmatprep.subr.mxu0 0.0
    %129 = vmatpush1.xpose.msra.mxu0 0.0
    %130 = vmatprep.subr.mxu0 0.0
    %131 = vmatpush1.xpose.msra.mxu0 0.0
    %132 = vmatprep.subr.mxu0 0.0
    %133 = vmatpush1.xpose.msra.mxu0 0.0
    %134 = vmatprep.subr.mxu0 0.0
    %135 = vmatpush1.xpose.msra.mxu0 0.0
    %136 = vmatprep.subr.mxu0 0.0
    %137 = vmatpush1.xpose.msra.mxu0 0.0
    %138 = vmatprep.subr.mxu0 0.0
    %139 = vmatpush1.xpose.msra.mxu0 0.0
    %140 = vmatprep.subr.mxu0 0.0
    %141 = vmatpush1.xpose.msra.mxu0 0.0
    %142 = vmatprep.subr.mxu0 0.0
    %143 = vmatpush1.xpose.msra.mxu0 0.0
    %144 = vmatprep.subr.mxu0 0.0
    %145 = vmatpush1.xpose.msra.mxu0 0.0
    %146 = vmatprep.subr.mxu0 0.0
    %147 = vmatpush1.xpose.msra.mxu0 0.0
    %148 = vmatprep.subr.mxu0 0.0
    %149 = vmatpush1.xpose.msra.mxu0 0.0
    %150 = vmatprep.subr.mxu0 0.0
    %151 = vmatpush1.xpose.msra.mxu0 0.0
    %152 = vmatprep.subr.mxu0 0.0
    %153 = vmatpush1.xpose.msra.mxu0 0.0
    %154 = vmatprep.mubr.f32.mxu0 %v43
    %155 = vmatmul.mubr.f32.gmra.mrb[0].mxu0 %v47
    %v156 = vpop.f32.mrb[0].mxu0
    %v157 = vadd.f32 %v88, %v156
    %v158 = vpop.f32.mrb[0].mxu0
    %159 = vmatprep.mubr.f32.mxu0 %v44
    %160 = vmatmul.mubr.f32.gmra.mrb[0].mxu0 %v48
    %v161 = vpop.f32.mrb[0].mxu0
    %v162 = vadd.f32 %v88, %v161
    %v163 = vpop.f32.mrb[0].mxu0
    %164 = vmatprep.mubr.f32.mxu0 %v45
    %165 = vmatmul.mubr.f32.gmra.mrb[0].mxu0 %v49
    %v166 = vpop.f32.mrb[0].mxu0
    %v167 = vadd.f32 %v88, %v166
    %v168 = vpop.f32.mrb[0].mxu0
    %169 = vmatprep.mubr.f32.mxu0 %v46
    %170 = vmatmul.mubr.f32.gmra.mrb[0].mxu0 %v50
    %v171 = vpop.f32.mrb[0].mxu0
    %v172 = vadd.f32 %v88, %v171
    %v173 = vpop.f32.mrb[0].mxu0
    %174 = vdwg.mxu0
    %175 = vst [vmem:[#allocation7] sm:$0xff] %v157
    %176 = vst [vmem:[#allocation7 + $0x8] sm:$0xff] %v162
    %177 = vst [vmem:[#allocation7 + $0x10] sm:$0xff] %v167
    %178 = vst [vmem:[#allocation7 + $0x18] sm:$0xff] %v172
    // Predicated region
    $region22: #{tpu_custom_call.1} parent=1 // pred_check
      _
    $region23: #{tpu_custom_call.1} parent=1 // pred_check_branch
      %180 = sbr.rel (0) target = $region25
    $region24: #{tpu_custom_call.1} parent=1 // pred_region
      %s182 = ssub.s32 512, 512
      %183 = vsyncadd [#allocation4], %s182
      %s184 = sshll.u32 [#allocation7], 4
      %s185 = int_to_ptr.vmem [resolvable:$true] %s184
      %190 = dma.vmem_to_hbm [thread:$0]  %s185, 512, %s3, [#allocation4], 128, 128, 8
    $region25: #{tpu_custom_call.1} parent=1 // pred_fallthru
      _
    // Predicated region
    $region26: #{tpu_custom_call.1} parent=1 // pred_check
      _
    $region27: #{tpu_custom_call.1} parent=1 // pred_check_branch
      %192 = sbr.rel (0) target = $region29
    $region28: #{tpu_custom_call.1} parent=1 // pred_region
      %193 = dma.done [#allocation4], 512
    $region29: #{tpu_custom_call.1} parent=1 // pred_fallthru
      _
    %194 = vsyncpa [#allocation3], 1
    %195 = vsyncpa [#allocation6], 1
    %196 = vsyncpa [#allocation4], 1

</llo_original>
